<compile_context>
chip_gen: v5e
topology: v5e:2x2
jax: 0.10.0
libtpu: 0.0.40
codegen_flags: <defaults>
</compile_context>

<pallas_src>
import functools

import jax
import jax.numpy as jnp
from jax.experimental import pallas as pl
from jax.experimental.pallas import tpu as pltpu

_LANES = 512     # lane-dense width (multiple of 128)
_TILE_ROWS = 512 # rows per tile: (512, 512) f32 tile = 1 MiB/buffer


def _normalized_coord_kernel(l_ref, o_ref, *, step, offset):
    # Elementwise hot path: cast int indices to f32, scale, shift (VPU filler
    # under the DMA; this kernel is purely HBM-bandwidth bound).
    x = l_ref[...].astype(jnp.float32)
    o_ref[...] = x * jnp.float32(step) + jnp.float32(offset)


def normalized_coordinate(l: jax.Array, L: int, align_corners: bool = False) -> jax.Array:
    """Pallas implementation of NormalizedCoordinate.forward(l, L)."""
    orig_shape = l.shape
    Lf = float(L)

    # Degenerate extent: int * 0.0 is exactly zero -> skip the input read entirely.
    if Lf == 1.0:
        return jnp.zeros(orig_shape, dtype=jnp.float32)

    if align_corners:
        step = 2.0 / (Lf - 1.0)
        offset = -1.0
    else:
        step = 2.0 / Lf
        offset = -1.0 + step / 2.0

    # ---- lane-dense re-tiling ------------------------------------------------
    flat = l.reshape(-1)
    n = flat.shape[0]

    rows = pl.cdiv(n, _LANES)
    if rows > _TILE_ROWS:
        block_rows = _TILE_ROWS
        rows_padded = pl.cdiv(rows, _TILE_ROWS) * _TILE_ROWS
    else:
        # Block covers the full (small) row extent -> always a legal block shape.
        block_rows = rows
        rows_padded = rows

    n_padded = rows_padded * _LANES
    if n_padded != n:
        flat = jnp.pad(flat, (0, n_padded - n))
    l2 = flat.reshape(rows_padded, _LANES)

    kernel = functools.partial(_normalized_coord_kernel, step=step, offset=offset)

    out2 = pl.pallas_call(
        kernel,
        out_shape=jax.ShapeDtypeStruct((rows_padded, _LANES), jnp.float32),
        grid=(rows_padded // block_rows,),
        in_specs=[pl.BlockSpec((block_rows, _LANES), lambda i: (i, 0))],
        out_specs=pl.BlockSpec((block_rows, _LANES), lambda i: (i, 0)),
        compiler_params=pltpu.CompilerParams(
            # Embarrassingly parallel elementwise op: lets v7x shard the grid
            # across its two TensorCores; harmless on v5e/v6e.
            dimension_semantics=("parallel",),
        ),
    )(l2)

    return out2.reshape(-1)[:n].reshape(orig_shape)


def _reference(l, L, align_corners):
    Lf = float(L)
    lf = l.astype(jnp.float32)
    if Lf == 1.0:
        return lf * 0.0
    elif align_corners:
        step = 2.0 / (Lf - 1.0)
        return -1.0 + lf * step
    else:
        step = 2.0 / Lf
        return -1.0 + step / 2.0 + lf * step


if __name__ == "__main__":
    ok = True

    # Small NCHW-style integer index tensor, values in [0, L).
    key = jax.random.PRNGKey(0)
    B, C, H, W = 2, 4, 16, 16
    L = 16
    l = jax.random.randint(key, (B, C, H, W), minval=0, maxval=L, dtype=jnp.int32)

    for align_corners in (False, True):
        out = jax.block_until_ready(normalized_coordinate(l, L, align_corners=align_corners))
        ref = _reference(l, L, align_corners)
        if out.shape != ref.shape or out.dtype != jnp.float32:
            ok = False
        if not jnp.allclose(out, ref, atol=1e-6, rtol=1e-6):
            ok = False

    # Degenerate L == 1 path (output must be exactly zero, no input read).
    out1 = jax.block_until_ready(normalized_coordinate(l, 1, align_corners=False))
    if out1.shape != l.shape or out1.dtype != jnp.float32:
        ok = False
    if not jnp.allclose(out1, jnp.zeros_like(out1)):
        ok = False

    # Odd shape -> exercises the lane-dense pad + single-block-rows path.
    l_odd = jax.random.randint(jax.random.PRNGKey(1), (3, 5, 37, 41),
                               minval=0, maxval=37, dtype=jnp.int32)
    out_odd = jax.block_until_ready(normalized_coordinate(l_odd, 37, align_corners=True))
    if not jnp.allclose(out_odd, _reference(l_odd, 37, True), atol=1e-6, rtol=1e-6):
        ok = False

    # Larger ragged shape -> exercises the multi-tile grid + row padding path.
    l_big = jax.random.randint(jax.random.PRNGKey(2), (2, 4, 256, 300),
                               minval=0, maxval=256, dtype=jnp.int32)
    out_big = jax.block_until_ready(normalized_coordinate(l_big, 256, align_corners=False))
    if not jnp.allclose(out_big, _reference(l_big, 256, False), atol=1e-6, rtol=1e-6):
        ok = False

    print("KERNEL_OK" if ok else "KERNEL_MISMATCH")
</pallas_src>

<mosaic_0001>
module attributes {stable_mosaic.version = 11 : i64} {
  func.func @_normalized_coord_kernel(%arg0: i32, %arg1: memref<4x512xi32, #tpu.memory_space<vmem>>, %arg2: memref<4x512xf32, #tpu.memory_space<vmem>>) attributes {dimension_semantics = [#tpu.dimension_semantics<parallel>], iteration_bounds = array<i64: 1>, scalar_prefetch = 0 : i64, scratch_operands = 0 : i64, tpu.core_type = #tpu.core_type<tc>, window_params = [{transform_indices = @transform_0, window_bounds = array<i64: 4, 512>}, {transform_indices = @transform_1, window_bounds = array<i64: 4, 512>}]} {
    %c0 = arith.constant 0 : index
    %c0_0 = arith.constant 0 : index
    %0 = vector.load %arg1[%c0, %c0_0] : memref<4x512xi32, #tpu.memory_space<vmem>>, vector<4x512xi32>
    %1 = arith.sitofp %0 : vector<4x512xi32> to vector<4x512xf32>
    %cst = arith.constant 1.250000e-01 : f32
    %2 = vector.broadcast %cst : f32 to vector<4x512xf32>
    %3 = arith.mulf %1, %2 : vector<4x512xf32>
    %cst_1 = arith.constant -9.375000e-01 : f32
    %4 = vector.broadcast %cst_1 : f32 to vector<4x512xf32>
    %5 = arith.addf %3, %4 : vector<4x512xf32>
    %c0_2 = arith.constant 0 : index
    %c0_3 = arith.constant 0 : index
    %6 = vector.load %arg2[%c0_2, %c0_3] : memref<4x512xf32, #tpu.memory_space<vmem>>, vector<4x512xf32>
    tpu.vector_store %arg2[%c0_2, %c0_3], %5 {strides = array<i32>} : memref<4x512xf32, #tpu.memory_space<vmem>>, vector<4x512xf32>,
    return
  }
  func.func @transform_0(%arg0: i32) -> (i32, i32) {
    %c0_i32 = arith.constant 0 : i32
    %c0_i32_0 = arith.constant 0 : i32
    return %arg0, %c0_i32 : i32, i32
  }
  func.func @transform_1(%arg0: i32) -> (i32, i32) {
    %c0_i32 = arith.constant 0 : i32
    %c0_i32_0 = arith.constant 0 : i32
    return %arg0, %c0_i32 : i32, i32
  }
}

</mosaic_0001>

<llo_original>
// kernel: tpu_custom_call.1
$region0: #{tpu_custom_call.1}
  #allocation0 [shape = 'u32[]', space=smem, size = 0x4, offset = 0x4, fixed_abs, tag = 'smem constant byte address 0x4 - core index']
  #allocation1 [shape = 'u32[72,128]{1,0:T(1,128)}', space=vmem, size = 0x9000, scoped, tag = 'internal scratch']
  %s0 = inlined_call_operand.hbm [shape: s32[4,512], index: 0, kind: input, shape index: {}]
  %s1 = inlined_call_operand.hbm [shape: f32[4,512], index: 1, kind: output, shape index: {}]
  %s2 = sld [smem:[#allocation0]]
  $region18: #{tpu_custom_call.1} parent=0
    _
  %s4 = ssub.s32 1, %s2
  %s5 = scalar_select 0, %s4, %s2
  $region1: #{tpu_custom_call.1} parent=0
    #allocation2 [shape = 'u8[8192]{0}', space=vmem, size = 0x2000, scoped, tag = 'input window, operand 0, single buffered']
    #allocation3 [shape = 's32[1]{0}', space=sflag, size = 0x4, scoped, tag = 'scoped memory for tpu_custom_call.1']
    #allocation4 [shape = 's32[1]{0}', space=sflag, size = 0x4, scoped, tag = 'scoped memory for tpu_custom_call.1']
    #allocation5 [shape = 'u8[8192]{0}', space=vmem, size = 0x2000, scoped, tag = 'output window, operand 0, single buffered']
    %6 = vsyncpa [#allocation3], 0
    %7 = vsyncpa [#allocation4], 0
    // Predicated region
    $region2: #{tpu_custom_call.1} parent=1 // pred_check
      _
    $region3: #{tpu_custom_call.1} parent=1 // pred_check_branch
      %9 = sbr.rel (0) target = $region5
    $region4: #{tpu_custom_call.1} parent=1 // pred_region
      %11 = vsyncadd [#allocation3], 0
      %s13 = sshll.u32 %s0, 4
      %s14 = int_to_ptr.hbm [resolvable:$true] %s13
      %s15 = sshll.u32 [#allocation2], 4
      %s16 = int_to_ptr.vmem [resolvable:$true] %s15
      %18 = dma.hbm_to_vmem [thread:$0]  %s14, 256, %s16, [#allocation3]
    $region5: #{tpu_custom_call.1} parent=1 // pred_fallthru
      _
    // Predicated region
    $region6: #{tpu_custom_call.1} parent=1 // pred_check
      _
    $region7: #{tpu_custom_call.1} parent=1 // pred_check_branch
      %20 = sbr.rel (0) target = $region9
    $region8: #{tpu_custom_call.1} parent=1 // pred_region
      %22 = dma.done [#allocation3], 256
    $region9: #{tpu_custom_call.1} parent=1 // pred_fallthru
      _
    %v23 = vld [vmem:[#allocation2] sm:$0xff]
    %v24 = vld [vmem:[#allocation2 + $0x8] sm:$0xff]
    %v25 = vcvt.s32.f32 %v23
    %v26 = vcvt.s32.f32 %v24
    %v27 = vmul.f32 %v25, 0.125
    %v28 = vmul.f32 %v26, 0.125
    %v29 = vadd.f32 %v27, -0.9375
    %v30 = vadd.f32 %v28, -0.9375
    %31 = vst [vmem:[#allocation5] sm:$0xff] %v29
    %32 = vst [vmem:[#allocation5 + $0x8] sm:$0xff] %v30
    // Predicated region
    $region10: #{tpu_custom_call.1} parent=1 // pred_check
      _
    $region11: #{tpu_custom_call.1} parent=1 // pred_check_branch
      %34 = sbr.rel (0) target = $region13
    $region12: #{tpu_custom_call.1} parent=1 // pred_region
      %36 = vsyncadd [#allocation4], 0
      %s38 = sshll.u32 [#allocation5], 4
      %s39 = int_to_ptr.vmem [resolvable:$true] %s38
      %s40 = sshll.u32 %s1, 4
      %s41 = int_to_ptr.hbm [resolvable:$true] %s40
      %43 = dma.vmem_to_hbm [thread:$0]  %s39, 256, %s41, [#allocation4]
    $region13: #{tpu_custom_call.1} parent=1 // pred_fallthru
      _
    // Predicated region
    $region14: #{tpu_custom_call.1} parent=1 // pred_check
      _
    $region15: #{tpu_custom_call.1} parent=1 // pred_check_branch
      %45 = sbr.rel (0) target = $region17
    $region16: #{tpu_custom_call.1} parent=1 // pred_region
      %47 = dma.done [#allocation4], 256
    $region17: #{tpu_custom_call.1} parent=1 // pred_fallthru
      _
    %48 = vsyncpa [#allocation3], 1
    %49 = vsyncpa [#allocation4], 1

</llo_original>
